<compile_context>
chip_gen: v7x
topology: tpu7x:2x2x1
jax: 0.10.0
libtpu: 0.0.40
codegen_flags: <defaults>
</compile_context>

<pallas_src>
import jax
import jax.numpy as jnp
from jax.experimental import pallas as pl
from jax.experimental.pallas import tpu as pltpu


# ----------------------------------------------------------------------------
# Fast path: whole tensor resident in VMEM, single kernel invocation.
# ----------------------------------------------------------------------------
def _gather_vmem_kernel(idx_ref, z_ref, out_ref):
    """out[i, :] = z[idx[i], :], everything resident in VMEM / SMEM."""
    z_dim = out_ref.shape[0]

    @pl.loop(0, z_dim)
    def _(i):
        src = idx_ref[i]
        out_ref[pl.ds(i, 1), :] = z_ref[pl.ds(src, 1), :]


def _gather_in_vmem(z2, indices):
    z_dim, d = z2.shape
    return pl.pallas_call(
        _gather_vmem_kernel,
        out_shape=jax.ShapeDtypeStruct((z_dim, d), z2.dtype),
        in_specs=[
            pl.BlockSpec(memory_space=pltpu.MemorySpace.SMEM),   # permutation
            pl.BlockSpec(memory_space=pltpu.MemorySpace.VMEM),   # z, full block
        ],
        out_specs=pl.BlockSpec(memory_space=pltpu.MemorySpace.VMEM),
    )(indices, z2)


# ----------------------------------------------------------------------------
# Tiled path: R-row batched manual DMA gather for HBM-resident / large z.
# ----------------------------------------------------------------------------
def _pick_lane_tile(d, max_tile):
    """Lane-dense tile: full d if small / not 128-aligned, else the largest
    multiple-of-128 divisor of d that is <= max_tile."""
    if d <= max_tile or d % 128 != 0:
        return d
    cand = max_tile - (max_tile % 128)
    while cand >= 128:
        if d % cand == 0:
            return cand
        cand -= 128
    return 128


def _make_tiled_kernel(R, TD, z_dim):
    def kernel(idx_ref, z_hbm, out_ref, buf, sem):
        i = pl.program_id(0)
        j = pl.program_id(1)
        col = pl.multiple_of(j * TD, TD)

        # Issue R independent row-gather DMAs; all stay in flight together,
        # which hides most of the scattered-row HBM latency.
        for r in range(R):
            row = i * R + r

            @pl.when(row < z_dim)       # guard the ragged row tail
            def _issue(r=r, row=row):
                src = idx_ref[row]
                pltpu.make_async_copy(
                    z_hbm.at[pl.ds(src, 1), pl.ds(col, TD)],
                    buf.at[pl.ds(r, 1), :],
                    sem.at[r],
                ).start()

        # Wait for each row's DMA (same guard as the matching start).
        for r in range(R):
            row = i * R + r

            @pl.when(row < z_dim)
            def _wait(r=r):
                pltpu.make_async_copy(
                    z_hbm.at[pl.ds(0, 1), pl.ds(0, TD)],   # shape-only for wait
                    buf.at[pl.ds(r, 1), :],
                    sem.at[r],
                ).wait()

        # One sublane+lane-dense store per step; Pallas clips the tail rows.
        out_ref[...] = buf[...]

    return kernel


def _gather_tiled(z2, indices):
    z_dim, d = z2.shape
    itemsize = z2.dtype.itemsize
    # Rows per step = sublanes per vreg for the dtype (unmasked stores).
    R = max(8, 32 // itemsize)
    # Lane tile sized for ~1 MiB staging blocks (VMEM footprint stays ~3 MiB
    # including the double-buffered output block -> safe on v5e/v6e/v7x).
    max_tile = max(512, (1 << 20) // (R * itemsize))
    TD = _pick_lane_tile(d, max_tile)
    n_i = pl.cdiv(z_dim, R)
    n_j = d // TD

    grid_spec = pltpu.PrefetchScalarGridSpec(
        num_scalar_prefetch=1,                       # permutation -> SMEM
        grid=(n_i, n_j),
        in_specs=[pl.BlockSpec(memory_space=pl.ANY)],  # z stays in HBM
        out_specs=pl.BlockSpec((R, TD), lambda i, j, idx_ref: (i, j)),
        scratch_shapes=[
            pltpu.VMEM((R, TD), z2.dtype),
            pltpu.SemaphoreType.DMA((R,)),
        ],
    )
    return pl.pallas_call(
        _make_tiled_kernel(R, TD, z_dim),
        out_shape=jax.ShapeDtypeStruct((z_dim, d), z2.dtype),
        grid_spec=grid_spec,
        compiler_params=pltpu.CompilerParams(
            dimension_semantics=("arbitrary", "arbitrary"),
        ),
    )(indices, z2)


# ----------------------------------------------------------------------------
# Public wrappers mirroring the PyTorch module.
# ----------------------------------------------------------------------------
_VMEM_FAST_PATH_BYTES = 2 * 1024 * 1024   # conservative across v5e/v6e/v7x


def permute_flow_apply(z, indices, *, force_tiled=False):
    """out = z[indices]: gather along the leading axis (PyTorch-style indexing)."""
    indices = jnp.asarray(indices, jnp.int32)
    z_dim = z.shape[0]
    assert indices.shape == (z_dim,)
    orig_shape = z.shape

    # Flatten trailing dims: the gather only permutes the leading axis.
    # 1-D z becomes (z_dim, 1) and takes the single-invocation fast path.
    # TODO(synk): for huge 1-D z (z_dim >> 10k) a lane-axis / one-hot gather
    # would beat the per-row loop; unnecessary at normalizing-flow sizes.
    z2 = z.reshape(z_dim, -1)

    nbytes = z2.size * z2.dtype.itemsize
    if force_tiled or nbytes > _VMEM_FAST_PATH_BYTES:
        out = _gather_tiled(z2, indices)
    else:
        out = _gather_in_vmem(z2, indices)
    return out.reshape(orig_shape)


def permute_flow_forward(z, permute):
    return permute_flow_apply(z, permute)


def permute_flow_inverse(z, sort):
    return permute_flow_apply(z, sort)


def init_permute_flow(key, z_dim):
    """Mirror PermuteFlow.__init__: permute = randperm(z_dim); sort = argsort(permute)."""
    permute = jax.random.permutation(key, z_dim).astype(jnp.int32)
    sort = jnp.argsort(permute).astype(jnp.int32)
    return {"permute": permute, "sort": sort}


if __name__ == "__main__":
    key = jax.random.PRNGKey(0)
    (k_perm, k_z2d, k_z1d,
     k_big, k_perm_big, k_tail, k_perm_tail) = jax.random.split(key, 7)

    # --- Typical flow latent: fast (single-invocation, in-VMEM) path -------
    z_dim, feat = 32, 128
    buffers = init_permute_flow(k_perm, z_dim)

    z2d = jax.random.normal(k_z2d, (z_dim, feat), jnp.float32)
    out2d = permute_flow_forward(z2d, buffers["permute"])
    jax.block_until_ready(out2d)
    assert jnp.array_equal(out2d, z2d[buffers["permute"]]), "2-D forward mismatch"

    back = permute_flow_inverse(out2d, buffers["sort"])
    jax.block_until_ready(back)
    assert jnp.array_equal(back, z2d), "inverse round-trip mismatch"

    z1d = jax.random.normal(k_z1d, (z_dim,), jnp.float32)
    out1d = permute_flow_forward(z1d, buffers["permute"])
    jax.block_until_ready(out1d)
    assert jnp.array_equal(out1d, z1d[buffers["permute"]]), "1-D forward mismatch"

    # --- Large-z / HBM path: R-row batched manual-DMA gather ---------------
    big_dim, big_feat = 256, 512
    perm_big = jax.random.permutation(k_perm_big, big_dim).astype(jnp.int32)
    z_big = jax.random.normal(k_big, (big_dim, big_feat), jnp.float32)
    out_big = permute_flow_apply(z_big, perm_big, force_tiled=True)
    jax.block_until_ready(out_big)
    assert jnp.array_equal(out_big, z_big[perm_big]), "tiled forward mismatch"

    # Tiled path with a ragged row tail (z_dim not a multiple of R=8).
    tail_dim, tail_feat = 100, 256
    perm_tail = jax.random.permutation(k_perm_tail, tail_dim).astype(jnp.int32)
    z_tail = jax.random.normal(k_tail, (tail_dim, tail_feat), jnp.float32)
    out_tail = permute_flow_apply(z_tail, perm_tail, force_tiled=True)
    jax.block_until_ready(out_tail)
    assert jnp.array_equal(out_tail, z_tail[perm_tail]), "tiled tail mismatch"

    print("KERNEL_OK")
</pallas_src>

<mosaic_0001>
module attributes {stable_mosaic.version = 11 : i64} {
  func.func @_gather_vmem_kernel(%arg0: memref<32xi32, #tpu.memory_space<smem>>, %arg1: memref<32x128xf32, #tpu.memory_space<vmem>>, %arg2: memref<32x128xf32, #tpu.memory_space<vmem>>) attributes {dimension_semantics = [], scalar_prefetch = 0 : i64, scratch_operands = 0 : i64, tpu.core_type = #tpu.core_type<tc>} {
    %c0_i32 = arith.constant 0 : i32
    %c32_i32 = arith.constant 32 : i32
    %0 = arith.addi %c0_i32, %c32_i32 : i32
    %c1_i32 = arith.constant 1 : i32
    scf.for %arg3 = %c0_i32 to %0 step %c1_i32  : i32 {
      %c1_i32_1 = arith.constant 1 : i32
      %1 = arith.muli %arg3, %c1_i32_1 : i32
      %c0_i32_2 = arith.constant 0 : i32
      %2 = arith.addi %c0_i32_2, %1 : i32
      %3 = arith.index_cast %2 : i32 to index
      %4 = memref.load %arg0[%3] : memref<32xi32, #tpu.memory_space<smem>>
      %5 = arith.index_cast %4 : i32 to index
      %c0 = arith.constant 0 : index
      %6 = vector.load %arg1[%5, %c0] : memref<32x128xf32, #tpu.memory_space<vmem>>, vector<1x128xf32>
      %7 = arith.index_cast %2 : i32 to index
      %c0_3 = arith.constant 0 : index
      %8 = vector.load %arg2[%7, %c0_3] : memref<32x128xf32, #tpu.memory_space<vmem>>, vector<1x128xf32>
      tpu.vector_store %arg2[%7, %c0_3], %6 {strides = array<i32>} : memref<32x128xf32, #tpu.memory_space<vmem>>, vector<1x128xf32>,
    }
    %c32_i32_0 = arith.constant 32 : i32
    return
  }
}

</mosaic_0001>

<llo_original>
// kernel: tpu_custom_call.1
$region0: #{tpu_custom_call.1}
  #allocation0 [shape = 'u32[]', space=smem, size = 0x4, offset = 0x4, fixed_abs, tag = 'smem constant byte address 0x4 - core index']
  #allocation1 [shape = 'u32[144,128]{1,0:T(1,128)}', space=vmem, size = 0x12000, scoped, tag = 'internal scratch']
  %s0 = inlined_call_operand.hbm [shape: s32[32], index: 0, kind: input, shape index: {}]
  %s1 = inlined_call_operand.hbm [shape: f32[32,128], index: 1, kind: input, shape index: {}]
  %s2 = inlined_call_operand.hbm [shape: f32[32,128], index: 2, kind: output, shape index: {}]
  %s3 = sld [smem:[#allocation0]]
  $region33: #{tpu_custom_call.1} parent=0
    _
  %s5 = ssub.s32 1, %s3
  %s6 = scalar_select 0, %s5, %s3
  $region1: #{tpu_custom_call.1} parent=0
    #allocation2 [shape = 'u8[512]{0}', space=smem, size = 0x200, scoped, tag = 'input window, operand 0, single buffered']
    #allocation3 [shape = 's32[1]{0}', space=sflag, size = 0x4, scoped, tag = 'scoped memory for tpu_custom_call.1']
    #allocation4 [shape = 's32[1]{0}', space=sflag, size = 0x4, scoped, tag = 'scoped memory for tpu_custom_call.1']
    #allocation5 [shape = 's32[1]{0}', space=sflag, size = 0x4, scoped, tag = 'scoped memory for tpu_custom_call.1']
    #allocation6 [shape = 'u8[16384]{0}', space=vmem, size = 0x4000, scoped, tag = 'input window, operand 1, single buffered']
    #allocation7 [shape = 'u8[16384]{0}', space=vmem, size = 0x4000, scoped, tag = 'output window, operand 0, single buffered']
    %7 = vsyncpa [#allocation5], 0
    %8 = vsyncpa [#allocation3], 0
    %9 = vsyncpa [#allocation4], 0
    // Predicated region
    $region2: #{tpu_custom_call.1} parent=1 // pred_check
      _
    $region3: #{tpu_custom_call.1} parent=1 // pred_check_branch
      %11 = sbr.rel (0) target = $region5
    $region4: #{tpu_custom_call.1} parent=1 // pred_region
      %s13 = ssub.s32 16, 16
      %14 = vsyncadd [#allocation5], %s13
      %17 = dma.hbm_to_smem %s0, 16, [#allocation2], [#allocation5]
    $region5: #{tpu_custom_call.1} parent=1 // pred_fallthru
      _
    // Predicated region
    $region6: #{tpu_custom_call.1} parent=1 // pred_check
      _
    $region7: #{tpu_custom_call.1} parent=1 // pred_check_branch
      %19 = sbr.rel (0) target = $region9
    $region8: #{tpu_custom_call.1} parent=1 // pred_region
      %s21 = ssub.s32 512, 512
      %22 = vsyncadd [#allocation3], %s21
      %s23 = sshll.u32 [#allocation6], 4
      %s24 = int_to_ptr.vmem [resolvable:$true] %s23
      %29 = dma.hbm_to_vmem [thread:$0]  %s1, 512, %s24, [#allocation3], 128, 128, 8
    $region9: #{tpu_custom_call.1} parent=1 // pred_fallthru
      _
    // Predicated region
    $region10: #{tpu_custom_call.1} parent=1 // pred_check
      _
    $region11: #{tpu_custom_call.1} parent=1 // pred_check_branch
      %31 = sbr.rel (0) target = $region13
    $region12: #{tpu_custom_call.1} parent=1 // pred_region
      %32 = dma.done [#allocation5], 16
    $region13: #{tpu_custom_call.1} parent=1 // pred_fallthru
      _
    // Predicated region
    $region14: #{tpu_custom_call.1} parent=1 // pred_check
      _
    $region15: #{tpu_custom_call.1} parent=1 // pred_check_branch
      %34 = sbr.rel (0) target = $region17
    $region16: #{tpu_custom_call.1} parent=1 // pred_region
      %35 = dma.done [#allocation3], 512
    $region17: #{tpu_custom_call.1} parent=1 // pred_fallthru
      _
    %36 = sfence
    loop: start=0, step=1, limit=32
    $region18: #{tpu_custom_call.1} parent=1 // loop_pre_header
      _
    $region19: #{tpu_custom_call.1} parent=1 // loop_header
      %s38 = sphi 0, %s42
      %p39 = scmp.ge.s32.totalorder %s38, 32
    $region20: #{tpu_custom_call.1} parent=1 // loop_header_branch
      %41 = sbr.rel (%p39) target = $region24
    $region21: #{tpu_custom_call.1} parent=1 // loop_body
      %s43 = sld [smem:[#allocation2 + %s38]]
      %s44 = scalar_lea.vmem [#allocation6], %s43
      %v45 = vld [vmem:[%s44] sm:$0x1]
      %s46 = scalar_lea.vmem [#allocation7], %s38
      %47 = vst [vmem:[%s46] sm:$0x1] %v45
    $region22: #{tpu_custom_call.1} parent=1 // loop_footer
      %s42 = sadd.s32 1, %s38
    $region23: #{tpu_custom_call.1} parent=1 // loop_footer_branch
      %37 = sbr.rel target = $region19
    $region24: #{tpu_custom_call.1} parent=1 // loop_exit
      _
    // Predicated region
    $region25: #{tpu_custom_call.1} parent=1 // pred_check
      _
    $region26: #{tpu_custom_call.1} parent=1 // pred_check_branch
      %49 = sbr.rel (0) target = $region28
    $region27: #{tpu_custom_call.1} parent=1 // pred_region
      %s51 = ssub.s32 512, 512
      %52 = vsyncadd [#allocation4], %s51
      %s53 = sshll.u32 [#allocation7], 4
      %s54 = int_to_ptr.vmem [resolvable:$true] %s53
      %59 = dma.vmem_to_hbm [thread:$0]  %s54, 512, %s2, [#allocation4], 128, 128, 8
    $region28: #{tpu_custom_call.1} parent=1 // pred_fallthru
      _
    // Predicated region
    $region29: #{tpu_custom_call.1} parent=1 // pred_check
      _
    $region30: #{tpu_custom_call.1} parent=1 // pred_check_branch
      %61 = sbr.rel (0) target = $region32
    $region31: #{tpu_custom_call.1} parent=1 // pred_region
      %62 = dma.done [#allocation4], 512
    $region32: #{tpu_custom_call.1} parent=1 // pred_fallthru
      _
    %63 = vsyncpa [#allocation3], 1
    %64 = vsyncpa [#allocation4], 1
    %65 = vsyncpa [#allocation5], 1

</llo_original>
